<compile_context>
chip_gen: v6e
topology: v6e:2x2x1
jax: 0.10.0
libtpu: 0.0.40
codegen_flags: <defaults>
</compile_context>

<pallas_src>
import functools

import jax
import jax.numpy as jnp
from jax.experimental import pallas as pl
from jax.experimental.pallas import tpu as pltpu


def _round_up(v, m):
    return (v + m - 1) // m * m


def _linear_clamp_kernel(wb_ref, xt_ref, o_ref, *, k_features, min_value, max_value):
    # wb_ref: SMEM (K+1,) f32  -> [w_0..w_{K-1}, bias]
    # xt_ref: VMEM (K_pad, TB) f32, batch on the 128-lane axis
    # o_ref : VMEM (1, TB)     f32, lane-dense output tile
    acc = jnp.full(o_ref.shape, wb_ref[k_features], dtype=jnp.float32)  # bias
    for k in range(k_features):  # K=6: unrolled VPU FMAs, no MXU round-trip
        acc = acc + xt_ref[pl.ds(k, 1), :] * wb_ref[k]
    acc = jnp.maximum(acc, jnp.float32(min_value))
    if max_value is not None:
        acc = jnp.minimum(acc, jnp.float32(max_value))
    o_ref[...] = acc


def linear_clamp(x, weight, bias, min_value=-0.3, max_value=None, *, block_b=1024):
    """y = clamp(x @ W^T + b, min=min_value, max=max_value(optional)); x:(B,K), W:(1,K)."""
    B, K = x.shape
    N, K2 = weight.shape
    assert K == K2 and N == 1

    # Lane tile: multiple of 128; cap at block_b for good HBM pipelining at large B.
    tb = min(block_b, _round_up(B, 128))
    b_pad = _round_up(B, tb)
    k_pad = 8  # pad feature dim to a full sublane group (zeros are never read)

    # One-time wrapper transpose/pad: (B, K) -> (K_pad, B_pad), batch on lanes.
    xt = jnp.zeros((k_pad, b_pad), jnp.float32)
    xt = xt.at[:K, :B].set(x.astype(jnp.float32).T)

    # Weights + bias as 7 scalars in SMEM.
    wb = jnp.concatenate(
        [weight.reshape(-1).astype(jnp.float32), bias.reshape(-1).astype(jnp.float32)]
    )

    kernel = functools.partial(
        _linear_clamp_kernel, k_features=K, min_value=min_value, max_value=max_value
    )

    out = pl.pallas_call(
        kernel,
        out_shape=jax.ShapeDtypeStruct((1, b_pad), jnp.float32),
        grid=(b_pad // tb,),
        in_specs=[
            pl.BlockSpec(memory_space=pltpu.MemorySpace.SMEM),  # wb scalars
            pl.BlockSpec((k_pad, tb), lambda i: (0, i)),        # xt tile
        ],
        out_specs=pl.BlockSpec((1, tb), lambda i: (0, i)),      # lane-dense output
        compiler_params=pltpu.CompilerParams(dimension_semantics=("parallel",)),
    )(wb, xt)

    return out[0, :B].reshape(B, N)


if __name__ == "__main__":
    key = jax.random.PRNGKey(0)
    kx, kw, kb = jax.random.split(key, 3)

    B, K, N = 2, 6, 1  # batch=2, in_features=6, out_features=1

    x = jax.random.normal(kx, (B, K), dtype=jnp.float32)
    # Deterministic Linear(6, 1) params (PyTorch-style uniform init bound = 1/sqrt(K))
    bound = 1.0 / (K ** 0.5)
    weight = jax.random.uniform(kw, (N, K), minval=-bound, maxval=bound, dtype=jnp.float32)
    bias = jax.random.uniform(kb, (N,), minval=-bound, maxval=bound, dtype=jnp.float32)

    out = linear_clamp(x, weight, bias, min_value=-0.3, max_value=None)
    out = jax.block_until_ready(out)

    # Pure-JAX reference check
    ref = jnp.maximum(x @ weight.T + bias, -0.3)
    assert out.shape == (B, N)
    assert jnp.allclose(out, ref, atol=1e-5), (out, ref)

    print("KERNEL_OK")
</pallas_src>

<mosaic_0001>
module attributes {stable_mosaic.version = 11 : i64} {
  func.func @_linear_clamp_kernel(%arg0: i32, %arg1: memref<7xf32, #tpu.memory_space<smem>>, %arg2: memref<8x128xf32, #tpu.memory_space<vmem>>, %arg3: memref<1x128xf32, #tpu.memory_space<vmem>>) attributes {dimension_semantics = [#tpu.dimension_semantics<parallel>], iteration_bounds = array<i64: 1>, scalar_prefetch = 0 : i64, scratch_operands = 0 : i64, tpu.core_type = #tpu.core_type<tc>, window_params = [{transform_indices = @transform_0, window_bounds = array<i64: 7>}, {transform_indices = @transform_1, window_bounds = array<i64: 8, 128>}, {transform_indices = @transform_2, window_bounds = array<i64: 1, 128>}]} {
    %c6 = arith.constant 6 : index
    %0 = memref.load %arg1[%c6] : memref<7xf32, #tpu.memory_space<smem>>
    %1 = vector.broadcast %0 : f32 to vector<1x128xf32>
    %c0 = arith.constant 0 : index
    %c0_0 = arith.constant 0 : index
    %2 = vector.load %arg2[%c0, %c0_0] : memref<8x128xf32, #tpu.memory_space<vmem>>, vector<1x128xf32>
    %c0_1 = arith.constant 0 : index
    %3 = memref.load %arg1[%c0_1] : memref<7xf32, #tpu.memory_space<smem>>
    %4 = vector.broadcast %3 : f32 to vector<1x128xf32>
    %5 = arith.mulf %2, %4 : vector<1x128xf32>
    %6 = arith.addf %1, %5 : vector<1x128xf32>
    %c1 = arith.constant 1 : index
    %c0_2 = arith.constant 0 : index
    %7 = vector.load %arg2[%c1, %c0_2] : memref<8x128xf32, #tpu.memory_space<vmem>>, vector<1x128xf32>
    %c1_3 = arith.constant 1 : index
    %8 = memref.load %arg1[%c1_3] : memref<7xf32, #tpu.memory_space<smem>>
    %9 = vector.broadcast %8 : f32 to vector<1x128xf32>
    %10 = arith.mulf %7, %9 : vector<1x128xf32>
    %11 = arith.addf %6, %10 : vector<1x128xf32>
    %c2 = arith.constant 2 : index
    %c0_4 = arith.constant 0 : index
    %12 = vector.load %arg2[%c2, %c0_4] : memref<8x128xf32, #tpu.memory_space<vmem>>, vector<1x128xf32>
    %c2_5 = arith.constant 2 : index
    %13 = memref.load %arg1[%c2_5] : memref<7xf32, #tpu.memory_space<smem>>
    %14 = vector.broadcast %13 : f32 to vector<1x128xf32>
    %15 = arith.mulf %12, %14 : vector<1x128xf32>
    %16 = arith.addf %11, %15 : vector<1x128xf32>
    %c3 = arith.constant 3 : index
    %c0_6 = arith.constant 0 : index
    %17 = vector.load %arg2[%c3, %c0_6] : memref<8x128xf32, #tpu.memory_space<vmem>>, vector<1x128xf32>
    %c3_7 = arith.constant 3 : index
    %18 = memref.load %arg1[%c3_7] : memref<7xf32, #tpu.memory_space<smem>>
    %19 = vector.broadcast %18 : f32 to vector<1x128xf32>
    %20 = arith.mulf %17, %19 : vector<1x128xf32>
    %21 = arith.addf %16, %20 : vector<1x128xf32>
    %c4 = arith.constant 4 : index
    %c0_8 = arith.constant 0 : index
    %22 = vector.load %arg2[%c4, %c0_8] : memref<8x128xf32, #tpu.memory_space<vmem>>, vector<1x128xf32>
    %c4_9 = arith.constant 4 : index
    %23 = memref.load %arg1[%c4_9] : memref<7xf32, #tpu.memory_space<smem>>
    %24 = vector.broadcast %23 : f32 to vector<1x128xf32>
    %25 = arith.mulf %22, %24 : vector<1x128xf32>
    %26 = arith.addf %21, %25 : vector<1x128xf32>
    %c5 = arith.constant 5 : index
    %c0_10 = arith.constant 0 : index
    %27 = vector.load %arg2[%c5, %c0_10] : memref<8x128xf32, #tpu.memory_space<vmem>>, vector<1x128xf32>
    %c5_11 = arith.constant 5 : index
    %28 = memref.load %arg1[%c5_11] : memref<7xf32, #tpu.memory_space<smem>>
    %29 = vector.broadcast %28 : f32 to vector<1x128xf32>
    %30 = arith.mulf %27, %29 : vector<1x128xf32>
    %31 = arith.addf %26, %30 : vector<1x128xf32>
    %cst = arith.constant -3.000000e-01 : f32
    %32 = vector.broadcast %cst : f32 to vector<1x128xf32>
    %33 = arith.maximumf %31, %32 : vector<1x128xf32>
    %c0_12 = arith.constant 0 : index
    %c0_13 = arith.constant 0 : index
    %34 = vector.load %arg3[%c0_12, %c0_13] : memref<1x128xf32, #tpu.memory_space<vmem>>, vector<1x128xf32>
    tpu.vector_store %arg3[%c0_12, %c0_13], %33 {strides = array<i32>} : memref<1x128xf32, #tpu.memory_space<vmem>>, vector<1x128xf32>,
    return
  }
  func.func @transform_0(%arg0: i32) -> i32 {
    %c0_i32 = arith.constant 0 : i32
    %c0_i32_0 = arith.constant 0 : i32
    return %c0_i32 : i32
  }
  func.func @transform_1(%arg0: i32) -> (i32, i32) {
    %c0_i32 = arith.constant 0 : i32
    %c0_i32_0 = arith.constant 0 : i32
    return %c0_i32, %arg0 : i32, i32
  }
  func.func @transform_2(%arg0: i32) -> (i32, i32) {
    %c0_i32 = arith.constant 0 : i32
    %c0_i32_0 = arith.constant 0 : i32
    return %c0_i32, %arg0 : i32, i32
  }
}

</mosaic_0001>

<llo_original>
// kernel: tpu_custom_call.1
$region0: #{tpu_custom_call.1}
  #allocation0 [shape = 'u32[]', space=smem, size = 0x4, offset = 0x4, fixed_abs, tag = 'smem constant byte address 0x4 - core index']
  #allocation1 [shape = 'u32[144,128]{1,0:T(1,128)}', space=vmem, size = 0x12000, scoped, tag = 'internal scratch']
  %s0 = inlined_call_operand.hbm [shape: f32[7], index: 0, kind: input, shape index: {}]
  %s1 = inlined_call_operand.hbm [shape: f32[8,128], index: 1, kind: input, shape index: {}]
  %s2 = inlined_call_operand.hbm [shape: f32[1,128], index: 2, kind: output, shape index: {}]
  %s3 = sld [smem:[#allocation0]]
  $region26: #{tpu_custom_call.1} parent=0
    _
  %s5 = ssub.s32 1, %s3
  %s6 = scalar_select 0, %s5, %s3
  $region1: #{tpu_custom_call.1} parent=0
    #allocation2 [shape = 'u8[512]{0}', space=smem, size = 0x200, scoped, tag = 'input window, operand 0, single buffered']
    #allocation3 [shape = 's32[1]{0}', space=sflag, size = 0x4, scoped, tag = 'scoped memory for tpu_custom_call.1']
    #allocation4 [shape = 's32[1]{0}', space=sflag, size = 0x4, scoped, tag = 'scoped memory for tpu_custom_call.1']
    #allocation5 [shape = 's32[1]{0}', space=sflag, size = 0x4, scoped, tag = 'scoped memory for tpu_custom_call.1']
    #allocation6 [shape = 'u8[4096]{0}', space=vmem, size = 0x1000, scoped, tag = 'input window, operand 1, single buffered']
    #allocation7 [shape = 'u8[512]{0}', space=vmem, size = 0x400, scoped, tag = 'output window, operand 0, single buffered']
    %7 = vsyncpa [#allocation5], 0
    %8 = vsyncpa [#allocation3], 0
    %9 = vsyncpa [#allocation4], 0
    // Predicated region
    $region2: #{tpu_custom_call.1} parent=1 // pred_check
      _
    $region3: #{tpu_custom_call.1} parent=1 // pred_check_branch
      %11 = sbr.rel (0) target = $region5
    $region4: #{tpu_custom_call.1} parent=1 // pred_region
      %s13 = ssub.s32 16, 16
      %14 = vsyncadd [#allocation5], %s13
      %17 = dma.hbm_to_smem %s0, 16, [#allocation2], [#allocation5]
    $region5: #{tpu_custom_call.1} parent=1 // pred_fallthru
      _
    // Predicated region
    $region6: #{tpu_custom_call.1} parent=1 // pred_check
      _
    $region7: #{tpu_custom_call.1} parent=1 // pred_check_branch
      %19 = sbr.rel (0) target = $region9
    $region8: #{tpu_custom_call.1} parent=1 // pred_region
      %s21 = ssub.s32 128, 128
      %22 = vsyncadd [#allocation3], %s21
      %s24 = sshll.u32 [#allocation6], 4
      %s25 = int_to_ptr.vmem [resolvable:$true] %s24
      %27 = dma.hbm_to_vmem [thread:$0]  %s1, 128, %s25, [#allocation3]
    $region9: #{tpu_custom_call.1} parent=1 // pred_fallthru
      _
    // Predicated region
    $region10: #{tpu_custom_call.1} parent=1 // pred_check
      _
    $region11: #{tpu_custom_call.1} parent=1 // pred_check_branch
      %29 = sbr.rel (0) target = $region13
    $region12: #{tpu_custom_call.1} parent=1 // pred_region
      %30 = dma.done [#allocation5], 16
    $region13: #{tpu_custom_call.1} parent=1 // pred_fallthru
      _
    // Predicated region
    $region14: #{tpu_custom_call.1} parent=1 // pred_check
      _
    $region15: #{tpu_custom_call.1} parent=1 // pred_check_branch
      %32 = sbr.rel (0) target = $region17
    $region16: #{tpu_custom_call.1} parent=1 // pred_region
      %33 = dma.done [#allocation3], 128
    $region17: #{tpu_custom_call.1} parent=1 // pred_fallthru
      _
    %34 = sfence
    %s35 = sld [smem:[#allocation2 + $0x6]]
    %v36 = vstv %s35
    %v37 = vld [vmem:[#allocation6] sm:$0x1]
    %s38 = sld [smem:[#allocation2]]
    %v39 = vstv %s38
    %v40 = vmul.f32 %v37, %v39
    %v41 = vadd.f32 %v36, %v40
    %v42 = vld [vmem:[#allocation6 + $0x1] sm:$0x1]
    %s43 = sld [smem:[#allocation2 + $0x1]]
    %v44 = vstv %s43
    %v45 = vmul.f32 %v42, %v44
    %v46 = vadd.f32 %v41, %v45
    %v47 = vld [vmem:[#allocation6 + $0x2] sm:$0x1]
    %s48 = sld [smem:[#allocation2 + $0x2]]
    %v49 = vstv %s48
    %v50 = vmul.f32 %v47, %v49
    %v51 = vadd.f32 %v46, %v50
    %v52 = vld [vmem:[#allocation6 + $0x3] sm:$0x1]
    %s53 = sld [smem:[#allocation2 + $0x3]]
    %v54 = vstv %s53
    %v55 = vmul.f32 %v52, %v54
    %v56 = vadd.f32 %v51, %v55
    %v57 = vld [vmem:[#allocation6 + $0x4] sm:$0x1]
    %s58 = sld [smem:[#allocation2 + $0x4]]
    %v59 = vstv %s58
    %v60 = vmul.f32 %v57, %v59
    %v61 = vadd.f32 %v56, %v60
    %v62 = vld [vmem:[#allocation6 + $0x5] sm:$0x1]
    %s63 = sld [smem:[#allocation2 + $0x5]]
    %v64 = vstv %s63
    %v65 = vmul.f32 %v62, %v64
    %v66 = vadd.f32 %v61, %v65
    %v67 = vmax.f32 %v66, -0.3
    %68 = vst [vmem:[#allocation7] sm:$0x1] %v67
    // Predicated region
    $region18: #{tpu_custom_call.1} parent=1 // pred_check
      _
    $region19: #{tpu_custom_call.1} parent=1 // pred_check_branch
      %70 = sbr.rel (0) target = $region21
    $region20: #{tpu_custom_call.1} parent=1 // pred_region
      %s72 = ssub.s32 16, 16
      %73 = vsyncadd [#allocation4], %s72
      %s75 = sshll.u32 [#allocation7], 4
      %s76 = int_to_ptr.vmem [resolvable:$true] %s75
      %78 = dma.vmem_to_hbm [thread:$0]  %s76, 16, %s2, [#allocation4]
    $region21: #{tpu_custom_call.1} parent=1 // pred_fallthru
      _
    // Predicated region
    $region22: #{tpu_custom_call.1} parent=1 // pred_check
      _
    $region23: #{tpu_custom_call.1} parent=1 // pred_check_branch
      %80 = sbr.rel (0) target = $region25
    $region24: #{tpu_custom_call.1} parent=1 // pred_region
      %81 = dma.done [#allocation4], 16
    $region25: #{tpu_custom_call.1} parent=1 // pred_fallthru
      _
    %82 = vsyncpa [#allocation3], 1
    %83 = vsyncpa [#allocation4], 1
    %84 = vsyncpa [#allocation5], 1

</llo_original>
